<compile_context>
chip_gen: v7x
topology: tpu7x:2x2x1
jax: 0.10.0
libtpu: 0.0.40
codegen_flags: <defaults>
</compile_context>

<pallas_src>
import jax
import jax.numpy as jnp
from jax.experimental import pallas as pl
from jax.experimental.pallas import tpu as pltpu


_MAX_TILE_BYTES = 4 * 1024 * 1024        # per pipeline buffer (x4 buffers ~ 16 MiB)
_MIN_PALLAS_OUT_BYTES = 4 * 1024 * 1024  # below this, XLA broadcast wins


def _prompt_broadcast_kernel(prompt_ref, out_ref):
    # prompt_ref: (1, tile_rows, C) [copy]  or (1, 1, C) [shared: vreg broadcast]
    # out_ref:    (1, tile_rows, C)
    # Broadcast happens in vregs; in a store-bound kernel the VPU/load slots
    # have huge slack, so this is fully hidden behind the HBM writeback.
    out_ref[...] = jnp.broadcast_to(prompt_ref[...], out_ref.shape)


def _round_up(v, m):
    return -(-v // m) * m


def _round_down(v, m):
    return (v // m) * m


def _choose_tile_rows(rows, row_bytes, override=None):
    """Sublane tile (multiple of 8, or the full dim) within the VMEM budget.
    Ensures >= 2 node tiles when possible so v7x's two TensorCores both get
    work on the leading 'parallel' grid axis."""
    if rows <= 8:
        return rows                                   # full dim: always legal
    budget_rows = max(8, _round_down(_MAX_TILE_BYTES // max(1, row_bytes), 8))
    if override is not None:
        # Clamp + legalize a hand-picked tile (can't OOM v7x / fail (8,128)).
        tile = max(8, _round_down(int(override), 8))
        tile = min(tile, budget_rows)
    else:
        tile = budget_rows
    if tile >= rows:
        # Split so the leading 'parallel' axis has >= 2 iterations (megacore).
        tile = _round_up(pl.cdiv(rows, 2), 8)
    return min(tile, rows)


def graph_prompt_forward(x, prompts, mode="add", shared=False, *,
                         tile_rows=None, use_pallas=None):
    """
    x:       [B, N, D]   (only its shape is used, matching the PyTorch module)
    prompts: [1, 1, P] if shared else [1, num_nodes, P]
    returns: [B, N, P] (N = x's node dim if shared, else num_nodes)
    """
    if mode not in ("add", "concat"):
        raise ValueError("Unsupported mode: choose 'add' or 'concat'")
    if prompts.ndim != 3 or prompts.shape[0] != 1:
        raise ValueError(f"prompts must be [1, n, P], got {prompts.shape}")
    if shared and prompts.shape[1] != 1:
        raise ValueError("shared=True expects prompts of shape [1, 1, P]")

    B = x.shape[0]
    P = prompts.shape[-1]
    # Faithful to torch.expand(): shared broadcasts over x's node dim,
    # non-shared keeps the prompt's own node dim (no OOB if they differ).
    N = x.shape[1] if shared else prompts.shape[1]

    itemsize = jnp.dtype(prompts.dtype).itemsize
    out_bytes = B * N * P * itemsize

    if use_pallas is None:
        use_pallas = out_bytes >= _MIN_PALLAS_OUT_BYTES

    # Pick a lane-dense layout for the Pallas path.
    if P % 128 == 0:
        rows, C = N, P                      # native 3D layout is already lane-dense
        src = prompts                       # (1, 1 or N, P)
    elif (N * P) % 128 == 0:
        rows, C = (N * P) // 128, 128       # flatten to a [rows, 128] slab
        # Non-shared: free contiguous reshape.  Shared: one N*P-row XLA
        # materialisation (<= 2/B of the output traffic).
        src = jnp.broadcast_to(prompts, (1, N, P)).reshape(1, rows, C)
    else:
        use_pallas = False                  # no clean lane-dense tiling
        rows = C = None
        src = None

    if not use_pallas:
        # XLA's lazy broadcast already sits at the HBM write roofline.
        return jnp.broadcast_to(prompts, (B, N, P))

    src_rows = src.shape[1]                 # 1 (shared, aligned path) or rows
    tile = _choose_tile_rows(rows, C * itemsize, tile_rows)
    n_tiles = pl.cdiv(rows, tile)

    if src_rows == 1:
        # Node replication happens in vregs inside the kernel.
        prompt_spec = pl.BlockSpec((1, 1, C), lambda t, b: (0, 0, 0))
    else:
        # Block index constant across the inner batch axis -> Pallas skips
        # re-fetching the prompt tile on every batch step.
        prompt_spec = pl.BlockSpec((1, tile, C), lambda t, b: (0, t, 0))

    out = pl.pallas_call(
        _prompt_broadcast_kernel,
        out_shape=jax.ShapeDtypeStruct((B, rows, C), prompts.dtype),
        grid_spec=pltpu.PrefetchScalarGridSpec(
            num_scalar_prefetch=0,
            grid=(n_tiles, B),              # node tiles outer, batch inner
            in_specs=[prompt_spec],
            out_specs=pl.BlockSpec((1, tile, C), lambda t, b: (b, t, 0)),
        ),
        compiler_params=pltpu.CompilerParams(
            dimension_semantics=("parallel", "parallel"),   # v7x megacore
            vmem_limit_bytes=32 * 1024 * 1024,
        ),
        cost_estimate=pl.CostEstimate(
            flops=0, transcendentals=0,
            bytes_accessed=out_bytes + int(src.size) * itemsize),
    )(src)
    return out.reshape(B, N, P)


class GraphPromptJAX:
    """Deterministic-parameter JAX port of the GraphPrompt module."""

    def __init__(self, num_nodes, prompt_dim, mode="add", shared=False, key=None):
        if mode not in ("add", "concat"):
            raise ValueError("Unsupported mode: choose 'add' or 'concat'")
        self.mode = mode
        self.shared = shared
        if key is None:
            key = jax.random.PRNGKey(0)
        shape = (1, 1, prompt_dim) if shared else (1, num_nodes, prompt_dim)
        self.prompts = jax.random.normal(key, shape, jnp.float32)

    def __call__(self, x, **kwargs):
        # TODO(synk): the PyTorch reference returns only the expanded prompt for
        # both 'add' and 'concat' (x is unused); mirrored here intentionally.
        return graph_prompt_forward(x, self.prompts, self.mode, self.shared,
                                    **kwargs)


if __name__ == "__main__":
    key = jax.random.PRNGKey(0)
    kx, kp1, kp2, kp3 = jax.random.split(key, 4)

    B, N, D = 2, 32, 32
    x = jax.random.normal(kx, (B, N, D), jnp.float32)

    # --- 1) Non-shared, mode='add', P % 128 == 0 (aligned 3D path), forced
    #        Pallas with a manual tile override (exercises clamping + 4 tiles).
    P1 = 128
    m1 = GraphPromptJAX(num_nodes=N, prompt_dim=P1, mode="add",
                        shared=False, key=kp1)
    o1 = jax.block_until_ready(m1(x, use_pallas=True, tile_rows=8))
    r1 = jnp.broadcast_to(m1.prompts, (B, N, P1))
    assert o1.shape == (B, N, P1)
    assert jnp.allclose(o1, r1)

    # --- 2) Shared, mode='concat', aligned path: (1,1,P) block + in-kernel
    #        vreg broadcast over the node tile.
    m2 = GraphPromptJAX(num_nodes=N, prompt_dim=P1, mode="concat",
                        shared=True, key=kp2)
    o2 = jax.block_until_ready(m2(x, use_pallas=True))
    r2 = jnp.broadcast_to(m2.prompts, (B, N, P1))
    assert o2.shape == (B, N, P1)
    assert jnp.allclose(o2, r2)

    # --- 3) Non-shared, prompt_dim NOT a multiple of 128 -> lane-dense
    #        flattened [B, N*P/128, 128] path.
    P2 = 96
    m3 = GraphPromptJAX(num_nodes=N, prompt_dim=P2, mode="add",
                        shared=False, key=kp3)
    o3 = jax.block_until_ready(m3(x, use_pallas=True))
    r3 = jnp.broadcast_to(m3.prompts, (B, N, P2))
    assert o3.shape == (B, N, P2)
    assert jnp.allclose(o3, r3)

    # --- 4) Tiny-output dispatch (pure XLA broadcast, no kernel launch).
    o4 = jax.block_until_ready(m1(x))
    assert jnp.allclose(o4, r1)

    print("KERNEL_OK")
</pallas_src>

<mosaic_0001>
module attributes {stable_mosaic.version = 11 : i64} {
  func.func @_prompt_broadcast_kernel(%arg0: i32, %arg1: i32, %arg2: memref<1x8x128xf32, #tpu.memory_space<vmem>>, %arg3: memref<1x8x128xf32, #tpu.memory_space<vmem>>) attributes {dimension_semantics = [#tpu.dimension_semantics<parallel>, #tpu.dimension_semantics<parallel>], iteration_bounds = array<i64: 4, 2>, scalar_prefetch = 0 : i64, scratch_operands = 0 : i64, tpu.core_type = #tpu.core_type<tc>, window_params = [{transform_indices = @transform_0, window_bounds = array<i64: 1, 8, 128>}, {transform_indices = @transform_1, window_bounds = array<i64: 1, 8, 128>}]} {
    %c0 = arith.constant 0 : index
    %c0_0 = arith.constant 0 : index
    %c0_1 = arith.constant 0 : index
    %0 = vector.load %arg2[%c0, %c0_0, %c0_1] : memref<1x8x128xf32, #tpu.memory_space<vmem>>, vector<1x8x128xf32>
    %c0_2 = arith.constant 0 : index
    %c0_3 = arith.constant 0 : index
    %c0_4 = arith.constant 0 : index
    %1 = vector.load %arg3[%c0_2, %c0_3, %c0_4] : memref<1x8x128xf32, #tpu.memory_space<vmem>>, vector<1x8x128xf32>
    tpu.vector_store %arg3[%c0_2, %c0_3, %c0_4], %0 {strides = array<i32>} : memref<1x8x128xf32, #tpu.memory_space<vmem>>, vector<1x8x128xf32>,
    return
  }
  func.func @transform_0(%arg0: i32, %arg1: i32) -> (i32, i32, i32) {
    %c0_i32 = arith.constant 0 : i32
    %c0_i32_0 = arith.constant 0 : i32
    %c0_i32_1 = arith.constant 0 : i32
    return %c0_i32, %arg0, %c0_i32_0 : i32, i32, i32
  }
  func.func @transform_1(%arg0: i32, %arg1: i32) -> (i32, i32, i32) {
    %c0_i32 = arith.constant 0 : i32
    %c0_i32_0 = arith.constant 0 : i32
    return %arg1, %arg0, %c0_i32 : i32, i32, i32
  }
}

</mosaic_0001>

<llo_original>
// kernel: tpu_custom_call.1
$region0: #{tpu_custom_call.1}
  #allocation0 [shape = 'u32[]', space=smem, size = 0x4, offset = 0x4, fixed_abs, tag = 'smem constant byte address 0x4 - core index']
  #allocation1 [shape = 'u32[144,128]{1,0:T(1,128)}', space=vmem, size = 0x12000, scoped, tag = 'internal scratch']
  %s0 = inlined_call_operand.hbm [shape: f32[1,32,128], index: 0, kind: input, shape index: {}]
  %s1 = inlined_call_operand.hbm [shape: f32[2,32,128], index: 1, kind: output, shape index: {}]
  %s2 = sld [smem:[#allocation0]]
  $region41: #{tpu_custom_call.1} parent=0
    _
  %s4 = ssub.s32 1, %s2
  %s5 = scalar_select 0, %s4, %s2
  $region1: #{tpu_custom_call.1} parent=0
    #allocation2 [shape = 'u8[8192]{0}', space=vmem, size = 0x2000, scoped, tag = 'input window, operand 0']
    #allocation3 [shape = 's32[2]{0}', space=sflag, size = 0x8, scoped, tag = 'scoped memory for tpu_custom_call.1']
    #allocation4 [shape = 's32[2]{0}', space=sflag, size = 0x8, scoped, tag = 'scoped memory for tpu_custom_call.1']
    #allocation5 [shape = 'u8[8192]{0}', space=vmem, size = 0x2000, scoped, tag = 'output window, operand 0']
    %6 = vsyncpa [#allocation3], 0
    %s7 = scalar_lea.sflag [#allocation3], 1
    %8 = vsyncpa %s7, 0
    %9 = vsyncpa [#allocation4], 0
    %s10 = scalar_lea.sflag [#allocation4], 1
    %11 = vsyncpa %s10, 0
    loop: start=0, step=1, limit=10
    $region2: #{tpu_custom_call.1} parent=1 // loop_pre_header
      _
    $region3: #{tpu_custom_call.1} parent=1 // loop_header
      %s13 = sphi 0, %s17
      %p14 = scmp.ge.s32.totalorder %s13, 10
      %s20 = sphi 0, %s32
      %s21 = sphi 0, %s28
      %s22 = sphi 0, %s20
      %s23 = sphi 0, %s21
      %s24 = sphi 0, %s22
      %s25 = sphi 0, %s23
      %s35 = sphi 0, %s37
      %s38 = sphi 0, %s35
      %s39 = sphi 0, %s38
      %s55 = sphi 0, %s39
      %s63 = sphi 0, %s65
      %s66 = sphi 0, %s63
      %s67 = sphi 0, %s66
      %s83 = sphi 0, %s67
    $region4: #{tpu_custom_call.1} parent=1 // loop_header_branch
      %16 = sbr.rel (%p14) target = $region8
    $region5: #{tpu_custom_call.1} parent=1 // loop_body
      %s18 = ssub.s32 %s13, 1
      %s19 = ssub.s32 %s13, 2
      %s26 = sadd.s32 1, %s21
      %p27 = scmp.ge.s32.totalorder %s26, 2
      %s28 = scalar_select %p27, 0, %s26
      %s29 = sadd.s32 1, %s20
      %s30 = scalar_select %p27, %s29, %s20
      %p31 = scmp.ge.s32.totalorder %s30, 4
      %s32 = scalar_select %p31, 0, %s30
      %s33 = ssub.s32 %s20, %s32
      %p34 = scmp.eq.s32.totalorder %s33, 0
      %s36 = sadd.s32 %s35, 1
      %s37 = scalar_select %p34, %s35, %s36
      %p40 = pneg %p34
      %p41 = scmp.eq.s32.totalorder %s13, 7
      %p42 = por %p40, %p41
      %p43 = scmp.ne.s32.totalorder %s35, %s38
      %p44 = scmp.eq.s32.totalorder %s13, 0
      %p45 = por %p43, %p44
      %p46 = scmp.ne.s32.totalorder %s35, %s38
      %p47 = scmp.eq.s32.totalorder %s18, 7
      %p48 = por %p46, %p47
      %p49 = scmp.ne.s32.totalorder %s38, %s39
      %p50 = scmp.eq.s32.totalorder %s18, 0
      %p51 = por %p49, %p50
      %p52 = scmp.ne.s32.totalorder %s38, %s39
      %p53 = scmp.eq.s32.totalorder %s19, 7
      %p54 = por %p52, %p53
      %p56 = scmp.ne.s32.totalorder %s39, %s55
      %p57 = scmp.eq.s32.totalorder %s19, 0
      %p58 = por %p56, %p57
      %s59 = ssub.s32 %s21, %s28
      %s60 = ssub.s32 %s20, %s32
      %s61 = sor.u32 %s59, %s60
      %p62 = scmp.eq.s32.totalorder %s61, 0
      %s64 = sadd.s32 %s63, 1
      %s65 = scalar_select %p62, %s63, %s64
      %p68 = pneg %p62
      %p69 = scmp.eq.s32.totalorder %s13, 7
      %p70 = por %p68, %p69
      %p71 = scmp.ne.s32.totalorder %s63, %s66
      %p72 = scmp.eq.s32.totalorder %s13, 0
      %p73 = por %p71, %p72
      %p74 = scmp.ne.s32.totalorder %s63, %s66
      %p75 = scmp.eq.s32.totalorder %s18, 7
      %p76 = por %p74, %p75
      %p77 = scmp.ne.s32.totalorder %s66, %s67
      %p78 = scmp.eq.s32.totalorder %s18, 0
      %p79 = por %p77, %p78
      %p80 = scmp.ne.s32.totalorder %s66, %s67
      %p81 = scmp.eq.s32.totalorder %s19, 7
      %p82 = por %p80, %p81
      %p84 = scmp.ne.s32.totalorder %s67, %s83
      %p85 = scmp.eq.s32.totalorder %s19, 0
      %p86 = por %p84, %p85
      %p87 = scmp.le.s32.totalorder 1, %s13
      %p88 = scmp.lt.s32.totalorder %s13, 9
      %p89 = pnand %p87, %p88
      %p90 = pneg %p89
      // Predicated region
      $region9: #{tpu_custom_call.1} parent=5 // pred_check
        _
      $region10: #{tpu_custom_call.1} parent=5 // pred_check_branch
        %92 = sbr.rel (%p89) target = $region12
      $region11: #{tpu_custom_call.1} parent=5 // pred_region
        %s93 = ssub.s32 %s13, 1
      $region12: #{tpu_custom_call.1} parent=5 // pred_fallthru
        _
      %p94 = scmp.lt.s32.totalorder %s13, 8
      // Predicated region
      $region13: #{tpu_custom_call.1} parent=5 // pred_check
        %p95 = pneg %p94
      $region14: #{tpu_custom_call.1} parent=5 // pred_check_branch
        %97 = sbr.rel (%p95) target = $region16
      $region15: #{tpu_custom_call.1} parent=5 // pred_region
        // Predicated region
        $region17: #{tpu_custom_call.1} parent=15 // pred_check
          %p98 = pneg %p45
        $region18: #{tpu_custom_call.1} parent=15 // pred_check_branch
          %100 = sbr.rel (%p98) target = $region20
        $region19: #{tpu_custom_call.1} parent=15 // pred_region
          %s101 = sand.u32 %s35, 1
          %s102 = scalar_lea.sflag [#allocation3], %s101
          %s103 = sand.u32 %s35, 1
          %s104 = smul.addr %s103, 8
          %s105 = scalar_lea.vmem [#allocation2], %s104
          %s107 = ssub.s32 128, 128
          %108 = vsyncadd %s102, %s107
          %s109 = smul.addr %s20, 128
          %s110 = scalar_lea.hbm %s0, %s109
          %s112 = sshll.u32 %s105, 4
          %s113 = int_to_ptr.vmem [resolvable:$true] %s112
          %115 = dma.hbm_to_vmem [thread:$0]  %s110, 128, %s113, %s102
        $region20: #{tpu_custom_call.1} parent=15 // pred_fallthru
          _
      $region16: #{tpu_custom_call.1} parent=5 // pred_fallthru
        _
      %p116 = scmp.le.s32.totalorder 1, %s13
      %p117 = scmp.lt.s32.totalorder %s13, 9
      %p118 = pnand %p116, %p117
      %p119 = pneg %p118
      // Predicated region
      $region21: #{tpu_custom_call.1} parent=5 // pred_check
        _
      $region22: #{tpu_custom_call.1} parent=5 // pred_check_branch
        %121 = sbr.rel (%p118) target = $region24
      $region23: #{tpu_custom_call.1} parent=5 // pred_region
        %s122 = ssub.s32 %s13, 1
        %s123 = sand.u32 %s38, 1
        %s124 = scalar_lea.sflag [#allocation3], %s123
        %s125 = sand.u32 %s38, 1
        %s126 = smul.addr %s125, 8
        %s127 = scalar_lea.vmem [#allocation2], %s126
        // Predicated region
        $region25: #{tpu_custom_call.1} parent=23 // pred_check
          %p128 = pneg %p51
        $region26: #{tpu_custom_call.1} parent=23 // pred_check_branch
          %130 = sbr.rel (%p128) target = $region28
        $region27: #{tpu_custom_call.1} parent=23 // pred_region
          %131 = dma.done %s124, 128
        $region28: #{tpu_custom_call.1} parent=23 // pred_fallthru
          _
        %s132 = sand.u32 %s38, 1
        %s133 = scalar_lea.sflag [#allocation3], %s132
        %s134 = sand.u32 %s38, 1
        %s135 = smul.addr %s134, 8
        %s136 = scalar_lea.vmem [#allocation2], %s135
        %p137 = pneg %p51
        %p138 = pneg %p48
        %p139 = pneg %p79
        %p140 = pneg %p76
        %s141 = sand.u32 %s66, 1
        %s142 = scalar_lea.sflag [#allocation4], %s141
        %s143 = sand.u32 %s66, 1
        %s144 = smul.addr %s143, 8
        %s145 = scalar_lea.vmem [#allocation5], %s144
        %v146 = vld [vmem:[%s127] sm:$0xff]
        %147 = vst [vmem:[%s145] sm:$0xff] %v146
        %s148 = sand.u32 %s66, 1
        %s149 = scalar_lea.sflag [#allocation4], %s148
        %s150 = sand.u32 %s66, 1
        %s151 = smul.addr %s150, 8
        %s152 = scalar_lea.vmem [#allocation5], %s151
        // Predicated region
        $region29: #{tpu_custom_call.1} parent=23 // pred_check
          %p153 = pneg %p76
        $region30: #{tpu_custom_call.1} parent=23 // pred_check_branch
          %155 = sbr.rel (%p153) target = $region32
        $region31: #{tpu_custom_call.1} parent=23 // pred_region
          %s157 = ssub.s32 128, 128
          %158 = vsyncadd %s149, %s157
          %s159 = smul.addr %s23, 4
          %s160 = sadd.s32 %s22, %s159
          %s161 = smul.addr %s160, 128
          %s162 = scalar_lea.hbm %s1, %s161
          %s164 = sshll.u32 %s152, 4
          %s165 = int_to_ptr.vmem [resolvable:$true] %s164
          %167 = dma.vmem_to_hbm [thread:$0]  %s165, 128, %s162, %s149
        $region32: #{tpu_custom_call.1} parent=23 // pred_fallthru
          _
      $region24: #{tpu_custom_call.1} parent=5 // pred_fallthru
        _
      %p168 = scmp.le.s32.totalorder 2, %s13
      // Predicated region
      $region33: #{tpu_custom_call.1} parent=5 // pred_check
        %p169 = pneg %p168
      $region34: #{tpu_custom_call.1} parent=5 // pred_check_branch
        %171 = sbr.rel (%p169) target = $region36
      $region35: #{tpu_custom_call.1} parent=5 // pred_region
        %s172 = ssub.s32 %s13, 2
        // Predicated region
        $region37: #{tpu_custom_call.1} parent=35 // pred_check
          %p173 = pneg %p82
        $region38: #{tpu_custom_call.1} parent=35 // pred_check_branch
          %175 = sbr.rel (%p173) target = $region40
        $region39: #{tpu_custom_call.1} parent=35 // pred_region
          %s176 = sand.u32 %s67, 1
          %s177 = scalar_lea.sflag [#allocation4], %s176
          %s178 = sand.u32 %s67, 1
          %s179 = smul.addr %s178, 8
          %s180 = scalar_lea.vmem [#allocation5], %s179
          %181 = dma.done %s177, 128
        $region40: #{tpu_custom_call.1} parent=35 // pred_fallthru
          _
      $region36: #{tpu_custom_call.1} parent=5 // pred_fallthru
        _
    $region6: #{tpu_custom_call.1} parent=1 // loop_footer
      %s17 = sadd.s32 1, %s13
    $region7: #{tpu_custom_call.1} parent=1 // loop_footer_branch
      %12 = sbr.rel target = $region3
    $region8: #{tpu_custom_call.1} parent=1 // loop_exit
      _
    %182 = vsyncpa [#allocation3], 1
    %s183 = scalar_lea.sflag [#allocation3], 1
    %184 = vsyncpa %s183, 1
    %185 = vsyncpa [#allocation4], 1
    %s186 = scalar_lea.sflag [#allocation4], 1
    %187 = vsyncpa %s186, 1

</llo_original>
